<compile_context>
chip_gen: v5e
topology: v5e:2x2
jax: 0.10.0
libtpu: 0.0.40
codegen_flags: <defaults>
</compile_context>

<pallas_src>
import math
import functools

import jax
import jax.numpy as jnp
from jax.experimental import pallas as pl
from jax.experimental.pallas import tpu as pltpu


def _round_up(x, m):
    return ((x + m - 1) // m) * m


# --------------------------------------------------------------------------
# Dense-targets kernel: exact forward semantics of the PyTorch module
# (works for arbitrary real-valued targets, e.g. label smoothing).
# --------------------------------------------------------------------------
def _aam_dense_kernel(out_ref, tgt_ref, res_ref, *, cos_m, sin_m, th, mm,
                      scale, easy_margin):
    cosine = out_ref[...].astype(jnp.float32)
    targets = tgt_ref[...].astype(jnp.float32)

    # sqrt routes to the EUP slot; clamp for numerical safety.
    sine = jnp.sqrt(jnp.maximum(1.0 - cosine * cosine, 0.0))
    phi = cosine * cos_m - sine * sin_m
    if easy_margin:
        phi = jnp.where(cosine > 0.0, phi, cosine)
    else:
        phi = jnp.where(cosine > th, phi, cosine - mm)

    out = targets * phi + (1.0 - targets) * cosine
    res_ref[...] = (scale * out).astype(res_ref.dtype)


def additive_angular_margin(outputs, targets, *, margin=0.2, scale=30.0,
                            easy_margin=False, block_b=256, block_c=2048):
    """AAM forward. outputs/targets: [B, C] (targets may be soft). f32 out."""
    B, C = outputs.shape
    # Lane-dense tiles, clamped for small inputs. 256x2048 f32 = 2 MiB/tile:
    # with 3 double-buffered streams (~12 MiB) this fits every generation.
    tb = min(block_b, _round_up(B, 8))
    tc = min(block_c, _round_up(C, 128))

    kernel = functools.partial(
        _aam_dense_kernel,
        cos_m=math.cos(margin), sin_m=math.sin(margin),
        th=math.cos(math.pi - margin), mm=math.sin(math.pi - margin) * margin,
        scale=scale, easy_margin=easy_margin)

    return pl.pallas_call(
        kernel,
        out_shape=jax.ShapeDtypeStruct((B, C), jnp.float32),
        grid_spec=pltpu.PrefetchScalarGridSpec(
            num_scalar_prefetch=0,
            grid=(pl.cdiv(B, tb), pl.cdiv(C, tc)),
            in_specs=[
                pl.BlockSpec((tb, tc), lambda i, j: (i, j)),
                pl.BlockSpec((tb, tc), lambda i, j: (i, j)),
            ],
            out_specs=pl.BlockSpec((tb, tc), lambda i, j: (i, j)),
        ),
        compiler_params=pltpu.CompilerParams(
            dimension_semantics=("parallel", "parallel"),
            vmem_limit_bytes=64 * 1024 * 1024),
    )(outputs, targets)


# --------------------------------------------------------------------------
# Label-based kernel: avoids streaming the dense one-hot matrix from HBM.
# Semantically identical to the module when `targets` is strictly one-hot.
# --------------------------------------------------------------------------
def _aam_label_kernel(lab_ref, out_ref, res_ref, *, cos_m, sin_m, th, mm,
                      scale, easy_margin, block_c):
    cosine = out_ref[...].astype(jnp.float32)

    sine = jnp.sqrt(jnp.maximum(1.0 - cosine * cosine, 0.0))
    phi = cosine * cos_m - sine * sin_m
    if easy_margin:
        phi = jnp.where(cosine > 0.0, phi, cosine)
    else:
        phi = jnp.where(cosine > th, phi, cosine - mm)

    # Rebuild the one-hot mask in-kernel from integer labels (tb, 1).
    col = (jax.lax.broadcasted_iota(jnp.int32, cosine.shape, 1)
           + pl.program_id(1) * block_c)
    mask = col == lab_ref[...]                       # (tb,1) vs (tb,tc) broadcast

    out = jnp.where(mask, phi, cosine)
    res_ref[...] = (scale * out).astype(res_ref.dtype)


def additive_angular_margin_onehot(outputs, labels, *, margin=0.2, scale=30.0,
                                   easy_margin=False, block_b=256,
                                   block_c=2048):
    """AAM forward for one-hot targets given as integer labels [B]."""
    B, C = outputs.shape
    tb = min(block_b, _round_up(B, 8))
    tc = min(block_c, _round_up(C, 128))

    labels2d = labels.astype(jnp.int32).reshape(B, 1)

    kernel = functools.partial(
        _aam_label_kernel,
        cos_m=math.cos(margin), sin_m=math.sin(margin),
        th=math.cos(math.pi - margin), mm=math.sin(math.pi - margin) * margin,
        scale=scale, easy_margin=easy_margin, block_c=tc)

    return pl.pallas_call(
        kernel,
        out_shape=jax.ShapeDtypeStruct((B, C), jnp.float32),
        grid_spec=pltpu.PrefetchScalarGridSpec(
            num_scalar_prefetch=0,
            grid=(pl.cdiv(B, tb), pl.cdiv(C, tc)),
            in_specs=[
                pl.BlockSpec((tb, 1), lambda i, j: (i, 0)),   # labels (tiny)
                pl.BlockSpec((tb, tc), lambda i, j: (i, j)),  # cosine logits
            ],
            out_specs=pl.BlockSpec((tb, tc), lambda i, j: (i, j)),
        ),
        compiler_params=pltpu.CompilerParams(
            dimension_semantics=("parallel", "parallel"),
            vmem_limit_bytes=64 * 1024 * 1024),
    )(labels2d, outputs)


# --------------------------------------------------------------------------
# Pure-JAX reference (mirror of the PyTorch module).
# --------------------------------------------------------------------------
def _reference(outputs, targets, *, margin=0.2, scale=30.0, easy_margin=False):
    cos_m = math.cos(margin)
    sin_m = math.sin(margin)
    th = math.cos(math.pi - margin)
    mm = math.sin(math.pi - margin) * margin
    cosine = outputs.astype(jnp.float32)
    sine = jnp.sqrt(jnp.maximum(1.0 - cosine ** 2, 0.0))
    phi = cosine * cos_m - sine * sin_m
    if easy_margin:
        phi = jnp.where(cosine > 0, phi, cosine)
    else:
        phi = jnp.where(cosine > th, phi, cosine - mm)
    out = targets * phi + (1.0 - targets) * cosine
    return scale * out


if __name__ == "__main__":
    key = jax.random.PRNGKey(0)
    k1, k2 = jax.random.split(key)

    B, C = 8, 32  # batch, num_classes (small demo shapes)

    # Cosine-similarity-like logits in (-1, 1).
    outputs = jnp.tanh(jax.random.normal(k1, (B, C), dtype=jnp.float32))
    # Integer labels and their one-hot encoding (as the module expects).
    labels = jax.random.randint(k2, (B,), 0, C)
    targets = jax.nn.one_hot(labels, C, dtype=jnp.float32)

    expected = _reference(outputs, targets,
                          margin=0.2, scale=30.0, easy_margin=False)

    # General path (dense targets — exact module semantics).
    res_dense = additive_angular_margin(outputs, targets,
                                        margin=0.2, scale=30.0,
                                        easy_margin=False)
    res_dense = jax.block_until_ready(res_dense)
    assert res_dense.shape == (B, C)
    assert jnp.allclose(res_dense, expected, atol=1e-5, rtol=1e-5)

    # Optimized one-hot path (labels only — no dense one-hot HBM traffic).
    res_label = additive_angular_margin_onehot(outputs, labels,
                                               margin=0.2, scale=30.0,
                                               easy_margin=False)
    res_label = jax.block_until_ready(res_label)
    assert res_label.shape == (B, C)
    assert jnp.allclose(res_label, expected, atol=1e-5, rtol=1e-5)

    print("KERNEL_OK")
</pallas_src>

<mosaic_0001>
module attributes {stable_mosaic.version = 11 : i64} {
  func.func @_aam_dense_kernel(%arg0: i32, %arg1: i32, %arg2: memref<8x128xf32, #tpu.memory_space<vmem>>, %arg3: memref<8x128xf32, #tpu.memory_space<vmem>>, %arg4: memref<8x128xf32, #tpu.memory_space<vmem>>) attributes {dimension_semantics = [#tpu.dimension_semantics<parallel>, #tpu.dimension_semantics<parallel>], iteration_bounds = array<i64: 1, 1>, scalar_prefetch = 0 : i64, scratch_operands = 0 : i64, tpu.core_type = #tpu.core_type<tc>, window_params = [{transform_indices = @transform_0, window_bounds = array<i64: 8, 128>}, {transform_indices = @transform_1, window_bounds = array<i64: 8, 128>}, {transform_indices = @transform_2, window_bounds = array<i64: 8, 128>}]} {
    %c0 = arith.constant 0 : index
    %c0_0 = arith.constant 0 : index
    %0 = vector.load %arg2[%c0, %c0_0] : memref<8x128xf32, #tpu.memory_space<vmem>>, vector<8x128xf32>
    %c0_1 = arith.constant 0 : index
    %c0_2 = arith.constant 0 : index
    %1 = vector.load %arg3[%c0_1, %c0_2] : memref<8x128xf32, #tpu.memory_space<vmem>>, vector<8x128xf32>
    %2 = arith.mulf %0, %0 : vector<8x128xf32>
    %cst = arith.constant 1.000000e+00 : f32
    %3 = vector.broadcast %cst : f32 to vector<8x128xf32>
    %4 = arith.subf %3, %2 : vector<8x128xf32>
    %cst_3 = arith.constant 0.000000e+00 : f32
    %5 = vector.broadcast %cst_3 : f32 to vector<8x128xf32>
    %6 = arith.maximumf %4, %5 : vector<8x128xf32>
    %7 = math.sqrt %6 : vector<8x128xf32>
    %cst_4 = arith.constant 0.980066597 : f32
    %8 = vector.broadcast %cst_4 : f32 to vector<8x128xf32>
    %9 = arith.mulf %0, %8 : vector<8x128xf32>
    %cst_5 = arith.constant 0.198669329 : f32
    %10 = vector.broadcast %cst_5 : f32 to vector<8x128xf32>
    %11 = arith.mulf %7, %10 : vector<8x128xf32>
    %12 = arith.subf %9, %11 : vector<8x128xf32>
    %cst_6 = arith.constant -0.980066597 : f32
    %13 = vector.broadcast %cst_6 : f32 to vector<8x128xf32>
    %14 = arith.cmpf ogt, %0, %13 : vector<8x128xf32>
    %cst_7 = arith.constant 0.0397338644 : f32
    %15 = vector.broadcast %cst_7 : f32 to vector<8x128xf32>
    %16 = arith.subf %0, %15 : vector<8x128xf32>
    %17 = arith.select %14, %12, %16 : vector<8x128xi1>, vector<8x128xf32>
    %18 = arith.mulf %1, %17 : vector<8x128xf32>
    %cst_8 = arith.constant 1.000000e+00 : f32
    %19 = vector.broadcast %cst_8 : f32 to vector<8x128xf32>
    %20 = arith.subf %19, %1 : vector<8x128xf32>
    %21 = arith.mulf %20, %0 : vector<8x128xf32>
    %22 = arith.addf %18, %21 : vector<8x128xf32>
    %cst_9 = arith.constant 3.000000e+01 : f32
    %23 = vector.broadcast %cst_9 : f32 to vector<8x128xf32>
    %24 = arith.mulf %23, %22 : vector<8x128xf32>
    %c0_10 = arith.constant 0 : index
    %c0_11 = arith.constant 0 : index
    %25 = vector.load %arg4[%c0_10, %c0_11] : memref<8x128xf32, #tpu.memory_space<vmem>>, vector<8x128xf32>
    tpu.vector_store %arg4[%c0_10, %c0_11], %24 {strides = array<i32>} : memref<8x128xf32, #tpu.memory_space<vmem>>, vector<8x128xf32>,
    return
  }
  func.func @transform_0(%arg0: i32, %arg1: i32) -> (i32, i32) {
    %c0_i32 = arith.constant 0 : i32
    return %arg0, %arg1 : i32, i32
  }
  func.func @transform_1(%arg0: i32, %arg1: i32) -> (i32, i32) {
    %c0_i32 = arith.constant 0 : i32
    return %arg0, %arg1 : i32, i32
  }
  func.func @transform_2(%arg0: i32, %arg1: i32) -> (i32, i32) {
    %c0_i32 = arith.constant 0 : i32
    return %arg0, %arg1 : i32, i32
  }
}

</mosaic_0001>

<llo_original>
// kernel: tpu_custom_call.1
$region0: #{tpu_custom_call.1}
  #allocation0 [shape = 'u32[]', space=smem, size = 0x4, offset = 0x4, fixed_abs, tag = 'smem constant byte address 0x4 - core index']
  #allocation1 [shape = 'u32[72,128]{1,0:T(1,128)}', space=vmem, size = 0x9000, scoped, tag = 'internal scratch']
  %s0 = inlined_call_operand.hbm [shape: f32[8,32], index: 0, kind: input, shape index: {}]
  %s1 = inlined_call_operand.hbm [shape: f32[8,32], index: 1, kind: input, shape index: {}]
  %s2 = inlined_call_operand.hbm [shape: f32[8,32], index: 2, kind: output, shape index: {}]
  %s3 = sld [smem:[#allocation0]]
  $region26: #{tpu_custom_call.1} parent=0
    _
  %s5 = ssub.s32 1, %s3
  %s6 = scalar_select 0, %s5, %s3
  $region1: #{tpu_custom_call.1} parent=0
    #allocation2 [shape = 'u8[4096]{0}', space=vmem, size = 0x1000, scoped, tag = 'input window, operand 0, single buffered']
    #allocation3 [shape = 's32[1]{0}', space=sflag, size = 0x4, scoped, tag = 'scoped memory for tpu_custom_call.1']
    #allocation4 [shape = 's32[1]{0}', space=sflag, size = 0x4, scoped, tag = 'scoped memory for tpu_custom_call.1']
    #allocation5 [shape = 'u8[4096]{0}', space=vmem, size = 0x1000, scoped, tag = 'input window, operand 1, single buffered']
    #allocation6 [shape = 's32[1]{0}', space=sflag, size = 0x4, scoped, tag = 'scoped memory for tpu_custom_call.1']
    #allocation7 [shape = 'u8[4096]{0}', space=vmem, size = 0x1000, scoped, tag = 'output window, operand 0, single buffered']
    %7 = vsyncpa [#allocation3], 0
    %8 = vsyncpa [#allocation6], 0
    %9 = vsyncpa [#allocation4], 0
    // Predicated region
    $region2: #{tpu_custom_call.1} parent=1 // pred_check
      _
    $region3: #{tpu_custom_call.1} parent=1 // pred_check_branch
      %11 = sbr.rel (0) target = $region5
    $region4: #{tpu_custom_call.1} parent=1 // pred_region
      %13 = vsyncadd [#allocation3], 0
      %s15 = sshll.u32 %s0, 4
      %s16 = int_to_ptr.hbm [resolvable:$true] %s15
      %s17 = sshll.u32 [#allocation2], 4
      %s18 = int_to_ptr.vmem [resolvable:$true] %s17
      %20 = dma.hbm_to_vmem [thread:$0]  %s16, 128, %s18, [#allocation3]
    $region5: #{tpu_custom_call.1} parent=1 // pred_fallthru
      _
    // Predicated region
    $region6: #{tpu_custom_call.1} parent=1 // pred_check
      _
    $region7: #{tpu_custom_call.1} parent=1 // pred_check_branch
      %22 = sbr.rel (0) target = $region9
    $region8: #{tpu_custom_call.1} parent=1 // pred_region
      %24 = vsyncadd [#allocation6], 0
      %s26 = sshll.u32 %s1, 4
      %s27 = int_to_ptr.hbm [resolvable:$true] %s26
      %s28 = sshll.u32 [#allocation5], 4
      %s29 = int_to_ptr.vmem [resolvable:$true] %s28
      %31 = dma.hbm_to_vmem [thread:$0]  %s27, 128, %s29, [#allocation6]
    $region9: #{tpu_custom_call.1} parent=1 // pred_fallthru
      _
    // Predicated region
    $region10: #{tpu_custom_call.1} parent=1 // pred_check
      _
    $region11: #{tpu_custom_call.1} parent=1 // pred_check_branch
      %33 = sbr.rel (0) target = $region13
    $region12: #{tpu_custom_call.1} parent=1 // pred_region
      %35 = dma.done [#allocation3], 128
    $region13: #{tpu_custom_call.1} parent=1 // pred_fallthru
      _
    // Predicated region
    $region14: #{tpu_custom_call.1} parent=1 // pred_check
      _
    $region15: #{tpu_custom_call.1} parent=1 // pred_check_branch
      %37 = sbr.rel (0) target = $region17
    $region16: #{tpu_custom_call.1} parent=1 // pred_region
      %39 = dma.done [#allocation6], 128
    $region17: #{tpu_custom_call.1} parent=1 // pred_fallthru
      _
    %v40 = vld [vmem:[#allocation2] sm:$0xff]
    %v41 = vld [vmem:[#allocation5] sm:$0xff]
    %v42 = vmul.f32 %v40, %v40
    %v43 = vsub.f32 1.0, %v42
    %v44 = vmax.f32 %v43, 0.0
    %v45 = vrsqrt.pop %v44
    %v46 = vmul.f32 %v45, %v44
    %v47 = vmul.f32 %v46, %v45
    %v48 = vmul.f32 0.5, %v47
    %v49 = vsub.f32 1.5, %v48
    %v50 = vmul.f32 %v45, %v49
    %v51 = vmul.f32 %v44, %v50
    %vm52 = vcmp.eq.f32.partialorder %v44, inf
    %v53 = vsel %vm52, %v44, %v51
    %vm54 = vcmp.eq.f32.partialorder %v44, 0.0
    %v55 = vand.u32 %v44, 2147483648
    %v56 = vsel %vm54, %v55, %v53
    %v57 = vmul.f32 %v40, 0.9800666
    %v58 = vmul.f32 %v56, 0.19866933
    %v59 = vsub.f32 %v57, %v58
    %vm60 = vcmp.gt.f32.partialorder %v40, -0.9800666
    %v61 = vsub.f32 %v40, 0.039733864
    %v62 = vsel %vm60, %v59, %v61
    %v63 = vmul.f32 %v41, %v62
    %v64 = vsub.f32 1.0, %v41
    %v65 = vmul.f32 %v64, %v40
    %v66 = vadd.f32 %v63, %v65
    %v67 = vmul.f32 %v66, 30.0
    %68 = vst [vmem:[#allocation7] sm:$0xff] %v67
    // Predicated region
    $region18: #{tpu_custom_call.1} parent=1 // pred_check
      _
    $region19: #{tpu_custom_call.1} parent=1 // pred_check_branch
      %70 = sbr.rel (0) target = $region21
    $region20: #{tpu_custom_call.1} parent=1 // pred_region
      %72 = vsyncadd [#allocation4], 0
      %s74 = sshll.u32 [#allocation7], 4
      %s75 = int_to_ptr.vmem [resolvable:$true] %s74
      %s76 = sshll.u32 %s2, 4
      %s77 = int_to_ptr.hbm [resolvable:$true] %s76
      %79 = dma.vmem_to_hbm [thread:$0]  %s75, 128, %s77, [#allocation4]
    $region21: #{tpu_custom_call.1} parent=1 // pred_fallthru
      _
    // Predicated region
    $region22: #{tpu_custom_call.1} parent=1 // pred_check
      _
    $region23: #{tpu_custom_call.1} parent=1 // pred_check_branch
      %81 = sbr.rel (0) target = $region25
    $region24: #{tpu_custom_call.1} parent=1 // pred_region
      %83 = dma.done [#allocation4], 128
    $region25: #{tpu_custom_call.1} parent=1 // pred_fallthru
      _
    %84 = vsyncpa [#allocation3], 1
    %85 = vsyncpa [#allocation6], 1
    %86 = vsyncpa [#allocation4], 1

</llo_original>
